<compile_context>
chip_gen: v6e
topology: v6e:2x2x1
jax: 0.10.0
libtpu: 0.0.40
codegen_flags: <defaults>
</compile_context>

<pallas_src>
import functools

import jax
import jax.numpy as jnp
from jax.experimental import pallas as pl
from jax.experimental.pallas import tpu as pltpu


def _round_up(x, m):
    return (x + m - 1) // m * m


def mlp_kernel(x_ref, w1_ref, w2_ref, o_ref):
    # fc1 + relu: MXU matmul with f32 accumulation, VPU max.
    h = jnp.dot(x_ref[...], w1_ref[...], preferred_element_type=jnp.float32)
    h = jnp.maximum(h, 0.0)
    # fc2 + sigmoid: second MXU pass; sigmoid's exp runs on the EUP.
    y = jnp.dot(h.astype(w2_ref.dtype), w2_ref[...],
                preferred_element_type=jnp.float32)
    o_ref[...] = jax.nn.sigmoid(y).astype(o_ref.dtype)


def mlp_kernel_ktiled(x_ref, w1_ref, w2_ref, o_ref, h_acc):
    # Grid: (batch_tiles [parallel], k_tiles [arbitrary]).
    k = pl.program_id(1)

    @pl.when(k == 0)
    def _():
        h_acc[...] = jnp.zeros_like(h_acc)

    h_acc[...] += jnp.dot(x_ref[...], w1_ref[...],
                          preferred_element_type=jnp.float32)

    @pl.when(k == pl.num_programs(1) - 1)
    def _():
        h = jnp.maximum(h_acc[...], 0.0)
        y = jnp.dot(h.astype(w2_ref.dtype), w2_ref[...],
                    preferred_element_type=jnp.float32)
        o_ref[...] = jax.nn.sigmoid(y).astype(o_ref.dtype)


def mlp_forward(x, w1, w2, *, compute_dtype=None, out_dtype=jnp.float32):
    """sigmoid(relu(x @ w1) @ w2) as a Pallas TPU kernel.

    compute_dtype: optional dtype (e.g. jnp.bfloat16) for the MXU operands —
      valid on v5e/v6e/v7x (accumulation and relu/sigmoid stay f32).
    out_dtype: output dtype (default f32; bf16 halves output HBM writes).
    """
    B, input_dim = x.shape
    hidden = w1.shape[1]
    output_dim = w2.shape[1]

    if compute_dtype is not None:
        x = x.astype(compute_dtype)
        w1 = w1.astype(compute_dtype)
        w2 = w2.astype(compute_dtype)

    itemsize = jnp.dtype(x.dtype).itemsize
    out_itemsize = jnp.dtype(out_dtype).itemsize

    # Pad hidden to a lane-dense multiple of 128 (zero w1 cols / zero w2 rows are
    # a numerical no-op through relu; weights are tiny so the pad is cheap).
    hidden_p = _round_up(hidden, 128)
    if hidden_p != hidden:
        w1 = jnp.pad(w1, ((0, 0), (0, hidden_p - hidden)))
        w2 = jnp.pad(w2, ((0, hidden_p - hidden), (0, 0)))

    # Batch padded only to a multiple of 8 here (<= 7 extra rows).
    b8 = _round_up(B, 8)
    if b8 != B:
        x = jnp.pad(x, ((0, b8 - B), (0, 0)))

    # ---- K (input_dim) tiling: only when the untiled K would blow VMEM ----
    MAX_K_UNTILED = 2048            # 512-row f32 x-tile at K=2048 is 4 MiB
    if input_dim > MAX_K_UNTILED:
        tile_k = 512
        k_pad = _round_up(input_dim, tile_k)
        if k_pad != input_dim:      # zero K-padding is a numerical no-op
            x = jnp.pad(x, ((0, 0), (0, k_pad - input_dim)))
            w1 = jnp.pad(w1, ((0, k_pad - input_dim), (0, 0)))
        num_k = k_pad // tile_k
    else:
        tile_k = input_dim
        num_k = 1

    # ---- batch tile selection (byte-based) ----
    row_bytes = tile_k * itemsize + output_dim * out_itemsize + hidden_p * 4
    weight_bytes = (tile_k * hidden_p + hidden_p * output_dim) * itemsize
    TILE_BUDGET = 2 << 20           # ~<=2 MiB streamed per grid step

    single_block_bytes = b8 * row_bytes + weight_bytes
    if num_k == 1 and b8 < 256 and single_block_bytes <= TILE_BUDGET:
        # Tiny problem: one resident block, no pipeline overhead.
        tile_b = b8
    else:
        # Streaming path: >=2 parallel batch steps whenever the batch can split
        # (both v7x TCs get work), each tile within the byte budget. Prefer exact
        # divisors of b8 so no extra HBM re-pad copy of x is needed.
        max_tile = max(b8 // 2, 8)
        candidates = [c for c in (512, 256, 128, 64, 32, 16, 8)
                      if c <= max_tile and c * row_bytes <= TILE_BUDGET]
        if not candidates:
            candidates = [8]
        divisors = [c for c in candidates if b8 % c == 0]
        tile_b = divisors[0] if divisors else candidates[0]

    b_pad = _round_up(b8, tile_b)
    if b_pad != b8:
        x = jnp.pad(x, ((0, b_pad - b8), (0, 0)))
    num_b = b_pad // tile_b

    # ---- VMEM budget (double-buffered tiles + resident weights + scratch) ----
    tile_x_bytes = tile_b * tile_k * itemsize
    tile_out_bytes = tile_b * output_dim * out_itemsize
    scratch_bytes = tile_b * hidden_p * 4 if num_k > 1 else 0
    vmem_needed = 2 * (tile_x_bytes + tile_out_bytes + weight_bytes) + scratch_bytes
    vmem_limit = int(min(max(int(vmem_needed * 1.25) + (1 << 20), 16 << 20),
                         48 << 20))

    k_total = tile_k * num_k
    cost = pl.CostEstimate(
        flops=2 * b_pad * (k_total * hidden_p + hidden_p * output_dim),
        transcendentals=b_pad * output_dim,          # exp inside sigmoid
        bytes_accessed=(b_pad * k_total * itemsize
                        + (k_total * hidden_p + hidden_p * output_dim) * itemsize
                        + b_pad * output_dim * out_itemsize),
    )

    if num_k == 1:
        kernel = mlp_kernel
        grid = (num_b,)
        dims = ("parallel",)
        in_specs = [
            pl.BlockSpec((tile_b, tile_k), lambda i: (i, 0)),      # x tile
            pl.BlockSpec((tile_k, hidden_p), lambda i: (0, 0)),    # w1 resident
            pl.BlockSpec((hidden_p, output_dim), lambda i: (0, 0)),  # w2 resident
        ]
        out_specs = pl.BlockSpec((tile_b, output_dim), lambda i: (i, 0))
        scratch = []
    else:
        kernel = mlp_kernel_ktiled
        grid = (num_b, num_k)
        dims = ("parallel", "arbitrary")
        in_specs = [
            pl.BlockSpec((tile_b, tile_k), lambda i, k: (i, k)),     # x K-tile
            pl.BlockSpec((tile_k, hidden_p), lambda i, k: (k, 0)),   # w1 K-tile
            pl.BlockSpec((hidden_p, output_dim), lambda i, k: (0, 0)),
        ]
        out_specs = pl.BlockSpec((tile_b, output_dim), lambda i, k: (i, 0))
        scratch = [pltpu.VMEM((tile_b, hidden_p), jnp.float32)]

    out = pl.pallas_call(
        kernel,
        out_shape=jax.ShapeDtypeStruct((b_pad, output_dim), out_dtype),
        grid_spec=pltpu.PrefetchScalarGridSpec(
            num_scalar_prefetch=0,
            grid=grid,
            in_specs=in_specs,
            out_specs=out_specs,
            scratch_shapes=scratch,
        ),
        compiler_params=pltpu.CompilerParams(
            dimension_semantics=dims,
            vmem_limit_bytes=vmem_limit,
        ),
        cost_estimate=cost,
    )(x, w1, w2)

    return out if b_pad == B else out[:B]


def mlp_reference(x, w1, w2):
    h = jnp.maximum(x @ w1, 0.0)
    return jax.nn.sigmoid(h @ w2)


if __name__ == "__main__":
    key = jax.random.PRNGKey(0)
    kx, k1, k2, kx2, kx3 = jax.random.split(key, 5)

    def make_weights(ka, kb, input_dim, hidden, output_dim):
        bound1 = 1.0 / (input_dim ** 0.5)
        bound2 = 1.0 / (hidden ** 0.5)
        w1 = jax.random.uniform(ka, (input_dim, hidden), jnp.float32,
                                minval=-bound1, maxval=bound1)
        w2 = jax.random.uniform(kb, (hidden, output_dim), jnp.float32,
                                minval=-bound2, maxval=bound2)
        return w1, w2

    hidden = 64  # self.ddd in the PyTorch module

    # Case 1: small batch -> single-block path.
    B, Din, Dout = 16, 32, 32
    w1, w2 = make_weights(k1, k2, Din, hidden, Dout)
    x = jax.random.normal(kx, (B, Din), dtype=jnp.float32)
    ref = mlp_reference(x, w1, w2)
    out = jax.block_until_ready(mlp_forward(x, w1, w2))
    assert out.shape == (B, Dout)
    assert jnp.allclose(out, ref, atol=1e-5, rtol=1e-5)

    # Case 2: batch < 8 (exercises the fixed 8-row padding path).
    x_small = jax.random.normal(kx2, (3, Din), dtype=jnp.float32)
    ref_small = mlp_reference(x_small, w1, w2)
    out_small = jax.block_until_ready(mlp_forward(x_small, w1, w2))
    assert out_small.shape == (3, Dout)
    assert jnp.allclose(out_small, ref_small, atol=1e-5, rtol=1e-5)

    # Case 3: larger batch, multi-tile streaming path with non-128 dims.
    B3, Din3, Dout3 = 640, 48, 24
    w1b, w2b = make_weights(k1, k2, Din3, hidden, Dout3)
    x3 = jax.random.normal(kx3, (B3, Din3), dtype=jnp.float32)
    ref3 = mlp_reference(x3, w1b, w2b)
    out3 = jax.block_until_ready(mlp_forward(x3, w1b, w2b))
    assert out3.shape == (B3, Dout3)
    assert jnp.allclose(out3, ref3, atol=1e-5, rtol=1e-5)

    # Case 4: bf16 MXU operands (valid on v5e/v6e/v7x; elementwise stays f32).
    out_bf16 = jax.block_until_ready(
        mlp_forward(x, w1, w2, compute_dtype=jnp.bfloat16))
    assert out_bf16.shape == (B, Dout)
    assert jnp.allclose(out_bf16, ref, atol=3e-2, rtol=3e-2)

    print("KERNEL_OK")
</pallas_src>

<mosaic_0001>
module attributes {stable_mosaic.version = 11 : i64} {
  func.func @mlp_kernel(%arg0: i32, %arg1: memref<16x32xf32, #tpu.memory_space<vmem>>, %arg2: memref<32x128xf32, #tpu.memory_space<vmem>>, %arg3: memref<128x32xf32, #tpu.memory_space<vmem>>, %arg4: memref<16x32xf32, #tpu.memory_space<vmem>>) attributes {dimension_semantics = [#tpu.dimension_semantics<parallel>], iteration_bounds = array<i64: 1>, scalar_prefetch = 0 : i64, scratch_operands = 0 : i64, tpu.core_type = #tpu.core_type<tc>, window_params = [{transform_indices = @transform_0, window_bounds = array<i64: 16, 32>}, {pipeline_mode = #tpu.pipeline_mode<synchronous>, transform_indices = @transform_1, window_bounds = array<i64: 32, 128>}, {pipeline_mode = #tpu.pipeline_mode<synchronous>, transform_indices = @transform_2, window_bounds = array<i64: 128, 32>}, {transform_indices = @transform_3, window_bounds = array<i64: 16, 32>}]} {
    %c0 = arith.constant 0 : index
    %c0_0 = arith.constant 0 : index
    %0 = vector.load %arg1[%c0, %c0_0] : memref<16x32xf32, #tpu.memory_space<vmem>>, vector<16x32xf32>
    %c0_1 = arith.constant 0 : index
    %c0_2 = arith.constant 0 : index
    %1 = vector.load %arg2[%c0_1, %c0_2] : memref<32x128xf32, #tpu.memory_space<vmem>>, vector<32x128xf32>
    %cst = arith.constant dense<0.000000e+00> : vector<16x128xf32>
    %2 = tpu.matmul %0, %1, %cst {dimension_numbers = #tpu.dot_dimension_numbers<[1], [0], [0], [1], [0, 0, 1, 1], [], []>} : vector<16x32xf32>, vector<32x128xf32>, vector<16x128xf32> -> vector<16x128xf32>
    %cst_3 = arith.constant 0.000000e+00 : f32
    %3 = vector.broadcast %cst_3 : f32 to vector<16x128xf32>
    %4 = arith.maximumf %2, %3 : vector<16x128xf32>
    %c0_4 = arith.constant 0 : index
    %c0_5 = arith.constant 0 : index
    %5 = vector.load %arg3[%c0_4, %c0_5] : memref<128x32xf32, #tpu.memory_space<vmem>>, vector<128x32xf32>
    %cst_6 = arith.constant dense<0.000000e+00> : vector<16x32xf32>
    %6 = tpu.matmul %4, %5, %cst_6 {dimension_numbers = #tpu.dot_dimension_numbers<[1], [0], [0], [1], [0, 0, 1, 1], [], []>} : vector<16x128xf32>, vector<128x32xf32>, vector<16x32xf32> -> vector<16x32xf32>
    %7 = arith.negf %6 : vector<16x32xf32>
    %8 = math.exp %7 : vector<16x32xf32>
    %cst_7 = arith.constant 1.000000e+00 : f32
    %9 = vector.broadcast %cst_7 : f32 to vector<16x32xf32>
    %10 = arith.addf %9, %8 : vector<16x32xf32>
    %11 = arith.divf %9, %10 : vector<16x32xf32>
    %c0_8 = arith.constant 0 : index
    %c0_9 = arith.constant 0 : index
    %12 = vector.load %arg4[%c0_8, %c0_9] : memref<16x32xf32, #tpu.memory_space<vmem>>, vector<16x32xf32>
    tpu.vector_store %arg4[%c0_8, %c0_9], %11 {strides = array<i32>} : memref<16x32xf32, #tpu.memory_space<vmem>>, vector<16x32xf32>,
    return
  }
  func.func @transform_0(%arg0: i32) -> (i32, i32) {
    %c0_i32 = arith.constant 0 : i32
    %c0_i32_0 = arith.constant 0 : i32
    return %arg0, %c0_i32 : i32, i32
  }
  func.func @transform_1(%arg0: i32) -> (i32, i32) {
    %c0_i32 = arith.constant 0 : i32
    %c0_i32_0 = arith.constant 0 : i32
    %c0_i32_1 = arith.constant 0 : i32
    return %c0_i32, %c0_i32_0 : i32, i32
  }
  func.func @transform_2(%arg0: i32) -> (i32, i32) {
    %c0_i32 = arith.constant 0 : i32
    %c0_i32_0 = arith.constant 0 : i32
    %c0_i32_1 = arith.constant 0 : i32
    return %c0_i32, %c0_i32_0 : i32, i32
  }
  func.func @transform_3(%arg0: i32) -> (i32, i32) {
    %c0_i32 = arith.constant 0 : i32
    %c0_i32_0 = arith.constant 0 : i32
    return %arg0, %c0_i32 : i32, i32
  }
}

</mosaic_0001>

<llo_original>
// kernel: tpu_custom_call.1
$region0: #{tpu_custom_call.1}
  #allocation0 [shape = 'u32[]', space=smem, size = 0x4, offset = 0x4, fixed_abs, tag = 'smem constant byte address 0x4 - core index']
  #allocation1 [shape = 'u32[144,128]{1,0:T(1,128)}', space=vmem, size = 0x12000, scoped, tag = 'internal scratch']
  %s0 = inlined_call_operand.vmem [shape: f32[16,32], index: 0, kind: input, shape index: {}]
  %s1 = inlined_call_operand.vmem [shape: f32[32,128], index: 1, kind: input, shape index: {}]
  %s2 = inlined_call_operand.vmem [shape: f32[128,32], index: 2, kind: input, shape index: {}]
  %s3 = inlined_call_operand.hbm [shape: f32[16,32], index: 3, kind: output, shape index: {}]
  %s4 = sld [smem:[#allocation0]]
  $region22: #{tpu_custom_call.1} parent=0
    _
  %s6 = ssub.s32 1, %s4
  %s7 = scalar_select 0, %s6, %s4
  $region1: #{tpu_custom_call.1} parent=0
    #allocation2 [shape = 'u8[8192]{0}', space=vmem, size = 0x2000, scoped, tag = 'output window, operand 0, single buffered']
    #allocation3 [shape = 's32[1]{0}', space=sflag, size = 0x4, scoped, tag = 'scoped memory for tpu_custom_call.1']
    %8 = vsyncpa [#allocation3], 0
    // Predicated region
    $region2: #{tpu_custom_call.1} parent=1 // pred_check
      _
    $region3: #{tpu_custom_call.1} parent=1 // pred_check_branch
      %10 = sbr.rel (0) target = $region5
    $region4: #{tpu_custom_call.1} parent=1 // pred_region
      _
    $region5: #{tpu_custom_call.1} parent=1 // pred_fallthru
      _
    // Predicated region
    $region6: #{tpu_custom_call.1} parent=1 // pred_check
      _
    $region7: #{tpu_custom_call.1} parent=1 // pred_check_branch
      %12 = sbr.rel (0) target = $region9
    $region8: #{tpu_custom_call.1} parent=1 // pred_region
      _
    $region9: #{tpu_custom_call.1} parent=1 // pred_fallthru
      _
    // Predicated region
    $region10: #{tpu_custom_call.1} parent=1 // pred_check
      _
    $region11: #{tpu_custom_call.1} parent=1 // pred_check_branch
      %14 = sbr.rel (0) target = $region13
    $region12: #{tpu_custom_call.1} parent=1 // pred_region
      _
    $region13: #{tpu_custom_call.1} parent=1 // pred_fallthru
      _
    %v15 = vld [vmem:[%s0] sm:$0xff]
    %v16 = vld [vmem:[%s0 + $0x8] sm:$0xff]
    %v17 = vld [vmem:[%s1] sm:$0xff]
    %v18 = vld [vmem:[%s1 + $0x8] sm:$0xff]
    %v19 = vld [vmem:[%s1 + $0x10] sm:$0xff]
    %v20 = vld [vmem:[%s1 + $0x18] sm:$0xff]
    %vm21 = vcmask 261120
    %v23 = vsel %vm21, %v15, 0
    %v26 = vsel %vm21, %v16, 0
    %28 = vmatprep.subr.mxu0 0.0
    %29 = vmatpush1.msra.mxu0 0.0
    %30 = vmatprep.subr.mxu0 0.0
    %31 = vmatpush1.msra.mxu0 0.0
    %32 = vmatprep.subr.mxu0 0.0
    %33 = vmatpush1.msra.mxu0 0.0
    %34 = vmatprep.subr.mxu0 0.0
    %35 = vmatpush1.msra.mxu0 0.0
    %36 = vmatprep.subr.mxu0 0.0
    %37 = vmatpush1.msra.mxu0 0.0
    %38 = vmatprep.subr.mxu0 0.0
    %39 = vmatpush1.msra.mxu0 0.0
    %40 = vmatprep.subr.mxu0 0.0
    %41 = vmatpush1.msra.mxu0 0.0
    %42 = vmatprep.subr.mxu0 0.0
    %43 = vmatpush1.msra.mxu0 0.0
    %44 = vmatprep.subr.mxu0 0.0
    %45 = vmatpush1.msra.mxu0 0.0
    %46 = vmatprep.subr.mxu0 0.0
    %47 = vmatpush1.msra.mxu0 0.0
    %48 = vmatprep.subr.mxu0 0.0
    %49 = vmatpush1.msra.mxu0 0.0
    %50 = vmatprep.subr.mxu0 0.0
    %51 = vmatpush1.msra.mxu0 0.0
    %52 = vmatprep.subr.mxu0 0.0
    %53 = vmatpush1.msra.mxu0 %v20
    %54 = vmatprep.subr.mxu0 0.0
    %55 = vmatpush1.msra.mxu0 %v19
    %56 = vmatprep.subr.mxu0 0.0
    %57 = vmatpush1.msra.mxu0 %v18
    %58 = vmatprep.subr.mxu0 0.0
    %59 = vmatpush1.msra.mxu0 %v17
    %60 = vmatprep.subr.mxu0 0.0
    %61 = vmatpush2.msra.mxu0 0.0
    %62 = vmatprep.subr.mxu0 0.0
    %63 = vmatpush2.msra.mxu0 0.0
    %64 = vmatprep.subr.mxu0 0.0
    %65 = vmatpush2.msra.mxu0 0.0
    %66 = vmatprep.subr.mxu0 0.0
    %67 = vmatpush2.msra.mxu0 0.0
    %68 = vmatprep.subr.mxu0 0.0
    %69 = vmatpush2.msra.mxu0 0.0
    %70 = vmatprep.subr.mxu0 0.0
    %71 = vmatpush2.msra.mxu0 0.0
    %72 = vmatprep.subr.mxu0 0.0
    %73 = vmatpush2.msra.mxu0 0.0
    %74 = vmatprep.subr.mxu0 0.0
    %75 = vmatpush2.msra.mxu0 0.0
    %76 = vmatprep.subr.mxu0 0.0
    %77 = vmatpush2.msra.mxu0 0.0
    %78 = vmatprep.subr.mxu0 0.0
    %79 = vmatpush2.msra.mxu0 0.0
    %80 = vmatprep.subr.mxu0 0.0
    %81 = vmatpush2.msra.mxu0 0.0
    %82 = vmatprep.subr.mxu0 0.0
    %83 = vmatpush2.msra.mxu0 0.0
    %84 = vmatprep.subr.mxu0 0.0
    %85 = vmatpush2.msra.mxu0 0.0
    %86 = vmatprep.subr.mxu0 0.0
    %87 = vmatpush2.msra.mxu0 0.0
    %88 = vmatprep.subr.mxu0 0.0
    %89 = vmatpush2.msra.mxu0 0.0
    %90 = vmatprep.subr.mxu0 0.0
    %91 = vmatpush2.msra.mxu0 0.0
    %92 = vmatprep.mubr.f32.mxu0 0.0
    %93 = vmatmul.mubr.f32.gmra.mxu0 %v23
    %v94 = vpop.f32.mrf.mxu0
    %v95 = vadd.f32 0.0, %v94
    %v96 = vpop.f32.mrf.mxu0
    %97 = vmatprep.mubr.f32.mxu0 0.0
    %98 = vmatmul.mubr.f32.gmra.mxu0 %v26
    %v99 = vpop.f32.mrf.mxu0
    %v100 = vadd.f32 0.0, %v99
    %v101 = vpop.f32.mrf.mxu0
    %102 = vdwg.mxu0
    %v103 = vmax.f32 %v95, 0.0
    %v104 = vmax.f32 %v100, 0.0
    %v105 = vld [vmem:[%s2] sm:$0xff]
    %v106 = vld [vmem:[%s2 + $0x8] sm:$0xff]
    %v107 = vld [vmem:[%s2 + $0x10] sm:$0xff]
    %v108 = vld [vmem:[%s2 + $0x18] sm:$0xff]
    %v109 = vld [vmem:[%s2 + $0x20] sm:$0xff]
    %v110 = vld [vmem:[%s2 + $0x28] sm:$0xff]
    %v111 = vld [vmem:[%s2 + $0x30] sm:$0xff]
    %v112 = vld [vmem:[%s2 + $0x38] sm:$0xff]
    %v113 = vld [vmem:[%s2 + $0x40] sm:$0xff]
    %v114 = vld [vmem:[%s2 + $0x48] sm:$0xff]
    %v115 = vld [vmem:[%s2 + $0x50] sm:$0xff]
    %v116 = vld [vmem:[%s2 + $0x58] sm:$0xff]
    %v117 = vld [vmem:[%s2 + $0x60] sm:$0xff]
    %v118 = vld [vmem:[%s2 + $0x68] sm:$0xff]
    %v119 = vld [vmem:[%s2 + $0x70] sm:$0xff]
    %v120 = vld [vmem:[%s2 + $0x78] sm:$0xff]
    %121 = vmatprep.subr.mxu0 0.0
    %122 = vmatpush1.msra.mxu0 %v120
    %123 = vmatprep.subr.mxu0 0.0
    %124 = vmatpush1.msra.mxu0 %v119
    %125 = vmatprep.subr.mxu0 0.0
    %126 = vmatpush1.msra.mxu0 %v118
    %127 = vmatprep.subr.mxu0 0.0
    %128 = vmatpush1.msra.mxu0 %v117
    %129 = vmatprep.subr.mxu0 0.0
    %130 = vmatpush1.msra.mxu0 %v116
    %131 = vmatprep.subr.mxu0 0.0
    %132 = vmatpush1.msra.mxu0 %v115
    %133 = vmatprep.subr.mxu0 0.0
    %134 = vmatpush1.msra.mxu0 %v114
    %135 = vmatprep.subr.mxu0 0.0
    %136 = vmatpush1.msra.mxu0 %v113
    %137 = vmatprep.subr.mxu0 0.0
    %138 = vmatpush1.msra.mxu0 %v112
    %139 = vmatprep.subr.mxu0 0.0
    %140 = vmatpush1.msra.mxu0 %v111
    %141 = vmatprep.subr.mxu0 0.0
    %142 = vmatpush1.msra.mxu0 %v110
    %143 = vmatprep.subr.mxu0 0.0
    %144 = vmatpush1.msra.mxu0 %v109
    %145 = vmatprep.subr.mxu0 0.0
    %146 = vmatpush1.msra.mxu0 %v108
    %147 = vmatprep.subr.mxu0 0.0
    %148 = vmatpush1.msra.mxu0 %v107
    %149 = vmatprep.subr.mxu0 0.0
    %150 = vmatpush1.msra.mxu0 %v106
    %151 = vmatprep.subr.mxu0 0.0
    %152 = vmatpush1.msra.mxu0 %v105
    %153 = vmatprep.subr.mxu0 0.0
    %154 = vmatpush2.msra.mxu0 0.0
    %155 = vmatprep.subr.mxu0 0.0
    %156 = vmatpush2.msra.mxu0 0.0
    %157 = vmatprep.subr.mxu0 0.0
    %158 = vmatpush2.msra.mxu0 0.0
    %159 = vmatprep.subr.mxu0 0.0
    %160 = vmatpush2.msra.mxu0 0.0
    %161 = vmatprep.subr.mxu0 0.0
    %162 = vmatpush2.msra.mxu0 0.0
    %163 = vmatprep.subr.mxu0 0.0
    %164 = vmatpush2.msra.mxu0 0.0
    %165 = vmatprep.subr.mxu0 0.0
    %166 = vmatpush2.msra.mxu0 0.0
    %167 = vmatprep.subr.mxu0 0.0
    %168 = vmatpush2.msra.mxu0 0.0
    %169 = vmatprep.subr.mxu0 0.0
    %170 = vmatpush2.msra.mxu0 0.0
    %171 = vmatprep.subr.mxu0 0.0
    %172 = vmatpush2.msra.mxu0 0.0
    %173 = vmatprep.subr.mxu0 0.0
    %174 = vmatpush2.msra.mxu0 0.0
    %175 = vmatprep.subr.mxu0 0.0
    %176 = vmatpush2.msra.mxu0 0.0
    %177 = vmatprep.subr.mxu0 0.0
    %178 = vmatpush2.msra.mxu0 0.0
    %179 = vmatprep.subr.mxu0 0.0
    %180 = vmatpush2.msra.mxu0 0.0
    %181 = vmatprep.subr.mxu0 0.0
    %182 = vmatpush2.msra.mxu0 0.0
    %183 = vmatprep.subr.mxu0 0.0
    %184 = vmatpush2.msra.mxu0 0.0
    %185 = vmatprep.mubr.f32.mxu0 0.0
    %186 = vmatmul.mubr.f32.gmra.mxu0 %v103
    %v187 = vpop.f32.mrf.mxu0
    %v188 = vadd.f32 0.0, %v187
    %v189 = vpop.f32.mrf.mxu0
    %190 = vmatprep.mubr.f32.mxu0 0.0
    %191 = vmatmul.mubr.f32.gmra.mxu0 %v104
    %v192 = vpop.f32.mrf.mxu0
    %v193 = vadd.f32 0.0, %v192
    %v194 = vpop.f32.mrf.mxu0
    %195 = vdwg.mxu0
    %v196 = vxor.u32 %v188, 2147483648
    %v197 = vxor.u32 %v193, 2147483648
    %v198 = vmul.f32 %v196, 1.442695
    %v199 = vpow.pop %v198
    %v200 = vmul.f32 %v197, 1.442695
    %v201 = vpow.pop %v200
    %v202 = vadd.f32 %v199, 1.0
    %v203 = vadd.f32 %v201, 1.0
    %v204 = vrcp.pop %v202
    %v205 = vmul.f32 1.0, %v204
    %v206 = vrcp.pop %v203
    %v207 = vmul.f32 1.0, %v206
    %208 = vst.msk [vmem:[#allocation2] sm:$0xff] %vm21, %v205
    %209 = vst.msk [vmem:[#allocation2 + $0x8] sm:$0xff] %vm21, %v207
    // Predicated region
    $region14: #{tpu_custom_call.1} parent=1 // pred_check
      _
    $region15: #{tpu_custom_call.1} parent=1 // pred_check_branch
      %211 = sbr.rel (0) target = $region17
    $region16: #{tpu_custom_call.1} parent=1 // pred_region
      %s213 = ssub.s32 256, 256
      %214 = vsyncadd [#allocation3], %s213
      %s215 = sshll.u32 [#allocation2], 4
      %s216 = int_to_ptr.vmem [resolvable:$true] %s215
      %221 = dma.vmem_to_hbm [thread:$0]  %s216, 256, %s3, [#allocation3], 128, 128, 8
    $region17: #{tpu_custom_call.1} parent=1 // pred_fallthru
      _
    // Predicated region
    $region18: #{tpu_custom_call.1} parent=1 // pred_check
      _
    $region19: #{tpu_custom_call.1} parent=1 // pred_check_branch
      %223 = sbr.rel (0) target = $region21
    $region20: #{tpu_custom_call.1} parent=1 // pred_region
      %224 = dma.done [#allocation3], 256
    $region21: #{tpu_custom_call.1} parent=1 // pred_fallthru
      _
    %225 = vsyncpa [#allocation3], 1

</llo_original>
